<compile_context>
chip_gen: v6e
topology: v6e:2x2x1
jax: 0.10.0
libtpu: 0.0.40
codegen_flags: <defaults>
</compile_context>

<pallas_src>
import functools

import jax
import jax.numpy as jnp
from jax.experimental import pallas as pl
from jax.experimental.pallas import tpu as pltpu


def _round_up(x: int, m: int) -> int:
    return ((x + m - 1) // m) * m


def _compose_ffn_kernel(x_ref, w1_ref, b1_ref, w2_ref, b2_ref, mask_ref, o_ref):
    # x_ref:    (TR, D_in)     f32 token rows (cast to bf16 in-kernel)
    # w1_ref:   (D_in, H_p)    bf16    b1_ref: (1, H_p)      f32
    # w2_ref:   (H_p, D_out_p) bf16    b2_ref: (1, D_out_p)  f32
    # mask_ref: (TR, 1)        f32 0/1 per-token mask
    # o_ref:    (TR, D_out_p)  bf16
    m = mask_ref[...]
    x = x_ref[...].astype(jnp.bfloat16)          # cast here: no wrapper pass

    # --- encoder 1: relu(x @ W1 + b1) * mask ---  (f32 accumulation)
    h = jnp.dot(x, w1_ref[...], preferred_element_type=jnp.float32)
    h = jnp.maximum(h + b1_ref[...], 0.0) * m

    # --- encoder 2: relu(h @ W2 + b2) * mask ---  (bf16 LHS, f32 accumulation)
    y = jnp.dot(h.astype(jnp.bfloat16), w2_ref[...],
                preferred_element_type=jnp.float32)
    y = jnp.maximum(y + b2_ref[...], 0.0) * m

    o_ref[...] = y.astype(o_ref.dtype)


def _vmem_limit_bytes(tr: int, d_in: int, h_p: int, d_out_p: int) -> int:
    lane = lambda d: _round_up(d, 128)
    est = (
        2 * tr * lane(d_in) * 4          # x tiles, f32, double-buffered
        + 2 * tr * 128 * 4               # mask tiles (lane-padded)
        + 2 * tr * d_out_p * 2           # output tiles, bf16, double-buffered
        + lane(d_in) * h_p * 2           # W1 (bf16, single-buffered)
        + h_p * d_out_p * 2              # W2 (bf16, single-buffered)
        + 8 * h_p * 4 + 8 * d_out_p * 4  # biases (sublane-padded)
        + tr * h_p * (4 + 2)             # h intermediate (f32) + bf16 cast
    )
    # generous headroom for Mosaic internal scratch, never claim full v7x VMEM
    return int(min(max(2 * est + 8 * (1 << 20), 32 * (1 << 20)), 56 * (1 << 20)))


@functools.partial(jax.jit, static_argnames=("row_tile",))
def compose_seq2seq_encoder(inputs, mask, w1, b1, w2, b2, *, row_tile=1024):
    """inputs: (B, S, D_in) f32, mask: (B, S) bool -> (B, S, D_out) f32."""
    B, S, D_in = inputs.shape
    H = w1.shape[1]
    D_out = w2.shape[1]
    R = B * S

    # --- lane-dense padding of the post-matmul feature dims (multiples of 128)
    H_p = _round_up(H, 128)
    D_out_p = _round_up(D_out, 128)

    # --- row tiling: big tiles amortize per-step overhead; multiple of 32 so
    #     bf16 tiles keep full sublane packing even for small batches.
    TR = row_tile if R >= row_tile else _round_up(R, 32)
    R_p = _round_up(R, TR)
    n_tiles = R_p // TR

    # --- prepare operands.  Activations stay f32 & feature-unpadded (no extra
    #     HBM pass); only rows are padded (masked out) when R % TR != 0.
    x2d = inputs.reshape(R, D_in)
    mask2d = mask.reshape(R, 1).astype(jnp.float32)
    if R_p != R:
        x2d = jnp.pad(x2d, ((0, R_p - R), (0, 0)))
        mask2d = jnp.pad(mask2d, ((0, R_p - R), (0, 0)))  # padded rows masked

    # Parameters are tiny: pad/cast once (bf16 weights, f32 biases).
    w1_p = jnp.pad(w1, ((0, 0), (0, H_p - H))).astype(jnp.bfloat16)
    w2_p = jnp.pad(w2, ((0, H_p - H), (0, D_out_p - D_out))).astype(jnp.bfloat16)
    b1_p = jnp.pad(b1, (0, H_p - H)).reshape(1, H_p).astype(jnp.float32)
    b2_p = jnp.pad(b2, (0, D_out_p - D_out)).reshape(1, D_out_p).astype(jnp.float32)

    resident = dict(pipeline_mode=pl.Buffered(1))   # single-buffer resident params

    cost = pl.CostEstimate(
        flops=2 * R_p * (D_in * H_p + H_p * D_out_p),
        transcendentals=0,
        bytes_accessed=(x2d.size * 4 + mask2d.size * 4
                        + w1_p.size * 2 + w2_p.size * 2
                        + b1_p.size * 4 + b2_p.size * 4
                        + R_p * D_out_p * 2),
    )

    out2d = pl.pallas_call(
        _compose_ffn_kernel,
        out_shape=jax.ShapeDtypeStruct((R_p, D_out_p), jnp.bfloat16),
        grid=(n_tiles,),
        in_specs=[
            pl.BlockSpec((TR, D_in), lambda i: (i, 0)),                  # x rows
            pl.BlockSpec((D_in, H_p), lambda i: (0, 0), **resident),     # W1
            pl.BlockSpec((1, H_p), lambda i: (0, 0), **resident),        # b1
            pl.BlockSpec((H_p, D_out_p), lambda i: (0, 0), **resident),  # W2
            pl.BlockSpec((1, D_out_p), lambda i: (0, 0), **resident),    # b2
            pl.BlockSpec((TR, 1), lambda i: (i, 0)),                     # mask
        ],
        out_specs=pl.BlockSpec((TR, D_out_p), lambda i: (i, 0)),
        compiler_params=pltpu.CompilerParams(
            dimension_semantics=("parallel",),   # shard row tiles across TCs
            vmem_limit_bytes=_vmem_limit_bytes(TR, D_in, H_p, D_out_p),
        ),
        cost_estimate=cost,
    )(x2d, w1_p, b1_p, w2_p, b2_p, mask2d)

    # Slice padded rows/cols off and restore the caller-facing f32 dtype.
    return out2d[:R, :D_out].reshape(B, S, D_out).astype(inputs.dtype)


def _reference_f32(inputs, mask, w1, b1, w2, b2):
    m = mask[..., None].astype(inputs.dtype)
    h = jnp.maximum(inputs @ w1 + b1, 0.0) * m       # encoder 1
    y = jnp.maximum(h @ w2 + b2, 0.0) * m            # encoder 2
    return y


def _reference_bf16_quant(inputs, mask, w1, b1, w2, b2):
    # Same math with the bf16 rounding the kernel applies (x, W, h, output);
    # bf16 x bf16 products accumulate exactly in f32, so this tracks tightly.
    bq = lambda a: a.astype(jnp.bfloat16).astype(jnp.float32)
    m = mask[..., None].astype(jnp.float32)
    h = jnp.maximum(bq(inputs) @ bq(w1) + b1, 0.0) * m
    y = jnp.maximum(bq(h) @ bq(w2) + b2, 0.0) * m
    return bq(y)


if __name__ == "__main__":
    B, S, D_in, H, D_out = 2, 8, 32, 64, 32

    key = jax.random.PRNGKey(0)
    k_x, k_w1, k_b1, k_w2, k_b2, k_m = jax.random.split(key, 6)

    inputs = jax.random.normal(k_x, (B, S, D_in), dtype=jnp.float32)
    # deterministic synthetic parameters for the two composed encoders
    w1 = jax.random.normal(k_w1, (D_in, H), dtype=jnp.float32) * 0.1
    b1 = jax.random.normal(k_b1, (H,), dtype=jnp.float32) * 0.1
    w2 = jax.random.normal(k_w2, (H, D_out), dtype=jnp.float32) * 0.1
    b2 = jax.random.normal(k_b2, (D_out,), dtype=jnp.float32) * 0.1
    mask = jax.random.bernoulli(k_m, p=0.7, shape=(B, S))

    out = compose_seq2seq_encoder(inputs, mask, w1, b1, w2, b2)
    out = jax.block_until_ready(out)

    assert out.shape == (B, S, D_out)

    # tight check vs bf16-quantized reference (same rounding as the kernel)
    ref_q = _reference_bf16_quant(inputs, mask, w1, b1, w2, b2)
    assert jnp.allclose(out, ref_q, atol=2e-3, rtol=2e-3), "mismatch vs bf16 ref"

    # loose check vs full-f32 reference (semantic equivalence)
    ref_f = _reference_f32(inputs, mask, w1, b1, w2, b2)
    assert jnp.allclose(out, ref_f, atol=5e-2, rtol=5e-2), "mismatch vs f32 ref"

    # masked positions are exactly zero
    assert jnp.all(jnp.where(mask[..., None], True, out == 0.0))

    print("KERNEL_OK")
</pallas_src>

<mosaic_0001>
module attributes {stable_mosaic.version = 11 : i64} {
  func.func @_compose_ffn_kernel(%arg0: i32, %arg1: memref<32x32xf32, #tpu.memory_space<vmem>>, %arg2: memref<32x128xbf16, #tpu.memory_space<vmem>>, %arg3: memref<1x128xf32, #tpu.memory_space<vmem>>, %arg4: memref<128x128xbf16, #tpu.memory_space<vmem>>, %arg5: memref<1x128xf32, #tpu.memory_space<vmem>>, %arg6: memref<32x1xf32, #tpu.memory_space<vmem>>, %arg7: memref<32x128xbf16, #tpu.memory_space<vmem>>) attributes {dimension_semantics = [#tpu.dimension_semantics<parallel>], iteration_bounds = array<i64: 1>, scalar_prefetch = 0 : i64, scratch_operands = 0 : i64, tpu.core_type = #tpu.core_type<tc>, window_params = [{transform_indices = @transform_0, window_bounds = array<i64: 32, 32>}, {pipeline_mode = #tpu.pipeline_mode<synchronous>, transform_indices = @transform_1, window_bounds = array<i64: 32, 128>}, {pipeline_mode = #tpu.pipeline_mode<synchronous>, transform_indices = @transform_2, window_bounds = array<i64: 1, 128>}, {pipeline_mode = #tpu.pipeline_mode<synchronous>, transform_indices = @transform_3, window_bounds = array<i64: 128, 128>}, {pipeline_mode = #tpu.pipeline_mode<synchronous>, transform_indices = @transform_4, window_bounds = array<i64: 1, 128>}, {transform_indices = @transform_5, window_bounds = array<i64: 32, 1>}, {transform_indices = @transform_6, window_bounds = array<i64: 32, 128>}]} {
    %c0 = arith.constant 0 : index
    %c0_0 = arith.constant 0 : index
    %0 = vector.load %arg6[%c0, %c0_0] : memref<32x1xf32, #tpu.memory_space<vmem>>, vector<32x1xf32>
    %c0_1 = arith.constant 0 : index
    %c0_2 = arith.constant 0 : index
    %1 = vector.load %arg1[%c0_1, %c0_2] : memref<32x32xf32, #tpu.memory_space<vmem>>, vector<32x32xf32>
    %2 = arith.truncf %1 : vector<32x32xf32> to vector<32x32xbf16>
    %c0_3 = arith.constant 0 : index
    %c0_4 = arith.constant 0 : index
    %3 = vector.load %arg2[%c0_3, %c0_4] : memref<32x128xbf16, #tpu.memory_space<vmem>>, vector<32x128xbf16>
    %cst = arith.constant dense<0.000000e+00> : vector<32x128xf32>
    %4 = tpu.matmul %2, %3, %cst {dimension_numbers = #tpu.dot_dimension_numbers<[1], [0], [0], [1], [0, 0, 1, 1], [], []>} : vector<32x32xbf16>, vector<32x128xbf16>, vector<32x128xf32> -> vector<32x128xf32>
    %c0_5 = arith.constant 0 : index
    %c0_6 = arith.constant 0 : index
    %5 = vector.load %arg3[%c0_5, %c0_6] : memref<1x128xf32, #tpu.memory_space<vmem>>, vector<1x128xf32>
    %6 = vector.broadcast %5 : vector<1x128xf32> to vector<32x128xf32>
    %7 = arith.addf %4, %6 : vector<32x128xf32>
    %cst_7 = arith.constant 0.000000e+00 : f32
    %8 = vector.broadcast %cst_7 : f32 to vector<32x128xf32>
    %9 = arith.maximumf %7, %8 : vector<32x128xf32>
    %10 = vector.broadcast %0 : vector<32x1xf32> to vector<32x128xf32>
    %11 = arith.mulf %9, %10 : vector<32x128xf32>
    %12 = arith.truncf %11 : vector<32x128xf32> to vector<32x128xbf16>
    %c0_8 = arith.constant 0 : index
    %c0_9 = arith.constant 0 : index
    %13 = vector.load %arg4[%c0_8, %c0_9] : memref<128x128xbf16, #tpu.memory_space<vmem>>, vector<128x128xbf16>
    %cst_10 = arith.constant dense<0.000000e+00> : vector<32x128xf32>
    %14 = tpu.matmul %12, %13, %cst_10 {dimension_numbers = #tpu.dot_dimension_numbers<[1], [0], [0], [1], [0, 0, 1, 1], [], []>} : vector<32x128xbf16>, vector<128x128xbf16>, vector<32x128xf32> -> vector<32x128xf32>
    %c0_11 = arith.constant 0 : index
    %c0_12 = arith.constant 0 : index
    %15 = vector.load %arg5[%c0_11, %c0_12] : memref<1x128xf32, #tpu.memory_space<vmem>>, vector<1x128xf32>
    %16 = vector.broadcast %15 : vector<1x128xf32> to vector<32x128xf32>
    %17 = arith.addf %14, %16 : vector<32x128xf32>
    %cst_13 = arith.constant 0.000000e+00 : f32
    %18 = vector.broadcast %cst_13 : f32 to vector<32x128xf32>
    %19 = arith.maximumf %17, %18 : vector<32x128xf32>
    %20 = vector.broadcast %0 : vector<32x1xf32> to vector<32x128xf32>
    %21 = arith.mulf %19, %20 : vector<32x128xf32>
    %22 = arith.truncf %21 : vector<32x128xf32> to vector<32x128xbf16>
    %c0_14 = arith.constant 0 : index
    %c0_15 = arith.constant 0 : index
    %23 = vector.load %arg7[%c0_14, %c0_15] : memref<32x128xbf16, #tpu.memory_space<vmem>>, vector<32x128xbf16>
    tpu.vector_store %arg7[%c0_14, %c0_15], %22 {strides = array<i32>} : memref<32x128xbf16, #tpu.memory_space<vmem>>, vector<32x128xbf16>,
    return
  }
  func.func @transform_0(%arg0: i32) -> (i32, i32) {
    %c0_i32 = arith.constant 0 : i32
    %c0_i32_0 = arith.constant 0 : i32
    return %arg0, %c0_i32 : i32, i32
  }
  func.func @transform_1(%arg0: i32) -> (i32, i32) {
    %c0_i32 = arith.constant 0 : i32
    %c0_i32_0 = arith.constant 0 : i32
    %c0_i32_1 = arith.constant 0 : i32
    return %c0_i32, %c0_i32_0 : i32, i32
  }
  func.func @transform_2(%arg0: i32) -> (i32, i32) {
    %c0_i32 = arith.constant 0 : i32
    %c0_i32_0 = arith.constant 0 : i32
    %c0_i32_1 = arith.constant 0 : i32
    return %c0_i32, %c0_i32_0 : i32, i32
  }
  func.func @transform_3(%arg0: i32) -> (i32, i32) {
    %c0_i32 = arith.constant 0 : i32
    %c0_i32_0 = arith.constant 0 : i32
    %c0_i32_1 = arith.constant 0 : i32
    return %c0_i32, %c0_i32_0 : i32, i32
  }
  func.func @transform_4(%arg0: i32) -> (i32, i32) {
    %c0_i32 = arith.constant 0 : i32
    %c0_i32_0 = arith.constant 0 : i32
    %c0_i32_1 = arith.constant 0 : i32
    return %c0_i32, %c0_i32_0 : i32, i32
  }
  func.func @transform_5(%arg0: i32) -> (i32, i32) {
    %c0_i32 = arith.constant 0 : i32
    %c0_i32_0 = arith.constant 0 : i32
    return %arg0, %c0_i32 : i32, i32
  }
  func.func @transform_6(%arg0: i32) -> (i32, i32) {
    %c0_i32 = arith.constant 0 : i32
    %c0_i32_0 = arith.constant 0 : i32
    return %arg0, %c0_i32 : i32, i32
  }
}

</mosaic_0001>

<llo_original>
// kernel: compose_seq2seq_encoder.1
$region0: #{compose_seq2seq_encoder.1}
  #allocation0 [shape = 'u32[]', space=smem, size = 0x4, offset = 0x4, fixed_abs, tag = 'smem constant byte address 0x4 - core index']
  #allocation1 [shape = 'u32[144,128]{1,0:T(1,128)}', space=vmem, size = 0x12000, scoped, tag = 'internal scratch']
  %s0 = inlined_call_operand.vmem [shape: f32[32,32], index: 0, kind: input, shape index: {}]
  %s1 = inlined_call_operand.vmem [shape: bf16[32,128], index: 1, kind: input, shape index: {}]
  %s2 = inlined_call_operand.vmem [shape: f32[1,128], index: 2, kind: input, shape index: {}]
  %s3 = inlined_call_operand.vmem [shape: bf16[128,128], index: 3, kind: input, shape index: {}]
  %s4 = inlined_call_operand.vmem [shape: f32[1,128], index: 4, kind: input, shape index: {}]
  %s5 = inlined_call_operand.vmem [shape: f32[32,1], index: 5, kind: input, shape index: {}]
  %s6 = inlined_call_operand.vmem [shape: bf16[32,128], index: 6, kind: output, shape index: {}]
  %s7 = sld [smem:[#allocation0]]
  $region34: #{compose_seq2seq_encoder.1} parent=0
    _
  %s9 = ssub.s32 1, %s7
  %s10 = scalar_select 0, %s9, %s7
  // Predicated region
  $region2: #{compose_seq2seq_encoder.1} parent=0 // pred_check
    _
  $region3: #{compose_seq2seq_encoder.1} parent=0 // pred_check_branch
    %12 = sbr.rel (0) target = $region5
  $region4: #{compose_seq2seq_encoder.1} parent=0 // pred_region
    _
  $region5: #{compose_seq2seq_encoder.1} parent=0 // pred_fallthru
    _
  // Predicated region
  $region6: #{compose_seq2seq_encoder.1} parent=0 // pred_check
    _
  $region7: #{compose_seq2seq_encoder.1} parent=0 // pred_check_branch
    %14 = sbr.rel (0) target = $region9
  $region8: #{compose_seq2seq_encoder.1} parent=0 // pred_region
    _
  $region9: #{compose_seq2seq_encoder.1} parent=0 // pred_fallthru
    _
  // Predicated region
  $region10: #{compose_seq2seq_encoder.1} parent=0 // pred_check
    _
  $region11: #{compose_seq2seq_encoder.1} parent=0 // pred_check_branch
    %16 = sbr.rel (0) target = $region13
  $region12: #{compose_seq2seq_encoder.1} parent=0 // pred_region
    _
  $region13: #{compose_seq2seq_encoder.1} parent=0 // pred_fallthru
    _
  // Predicated region
  $region14: #{compose_seq2seq_encoder.1} parent=0 // pred_check
    _
  $region15: #{compose_seq2seq_encoder.1} parent=0 // pred_check_branch
    %18 = sbr.rel (0) target = $region17
  $region16: #{compose_seq2seq_encoder.1} parent=0 // pred_region
    _
  $region17: #{compose_seq2seq_encoder.1} parent=0 // pred_fallthru
    _
  // Predicated region
  $region18: #{compose_seq2seq_encoder.1} parent=0 // pred_check
    _
  $region19: #{compose_seq2seq_encoder.1} parent=0 // pred_check_branch
    %20 = sbr.rel (0) target = $region21
  $region20: #{compose_seq2seq_encoder.1} parent=0 // pred_region
    _
  $region21: #{compose_seq2seq_encoder.1} parent=0 // pred_fallthru
    _
  // Predicated region
  $region22: #{compose_seq2seq_encoder.1} parent=0 // pred_check
    _
  $region23: #{compose_seq2seq_encoder.1} parent=0 // pred_check_branch
    %22 = sbr.rel (0) target = $region25
  $region24: #{compose_seq2seq_encoder.1} parent=0 // pred_region
    _
  $region25: #{compose_seq2seq_encoder.1} parent=0 // pred_fallthru
    _
  %v24 = vld [vmem:[%s5] sm:$0xff]
  %v25 = vld [vmem:[%s5 + $0x8] sm:$0xff]
  %v26 = vld [vmem:[%s5 + $0x10] sm:$0xff]
  %v27 = vld [vmem:[%s5 + $0x18] sm:$0xff]
  %v28 = vld [vmem:[%s0] sm:$0xff]
  %v29 = vld [vmem:[%s0 + $0x8] sm:$0xff]
  %v30 = vld [vmem:[%s0 + $0x10] sm:$0xff]
  %v31 = vld [vmem:[%s0 + $0x18] sm:$0xff]
  %v32 = vpack.c.bf16 %v29, %v28
  %v33 = vpack.c.bf16 %v31, %v30
  %v34 = vld [vmem:[%s1] sm:$0xf]
  %v35 = vld [vmem:[%s1 + $0x4] sm:$0xf]
  %v36 = vld [vmem:[%s1 + $0x8] sm:$0xf]
  %v37 = vld [vmem:[%s1 + $0xc] sm:$0xf]
  %v38 = vld [vmem:[%s2] sm:$0x1]
  %v40 = vlaneseq
  %v41 = vshrl.u32 %v40, 7
  %v42 = vsub.s32 0, %v41
  %v43 = vrot.slane %v38, %v42
  %v49 = vunpack.c.l.b16 %v34
  %v50 = vunpack.c.l.b16 %v35
  %v51 = vunpack.c.l.b16 %v36
  %v52 = vunpack.c.l.b16 %v37
  %v53 = vpack.c.b16 %v50, %v49
  %v54 = vpack.c.b16 %v52, %v51
  %vm57 = vcmask 261120
  %v59 = vsel %vm57, %v32, 0
  %v62 = vsel %vm57, %v33, 0
  %64 = vmatprep.subr.bf16.mxu0 0
  %65 = vmatpush1.bf16.msra.mxu0 0
  %66 = vmatprep.subr.bf16.mxu0 0
  %67 = vmatpush1.bf16.msra.mxu0 0
  %68 = vmatprep.subr.bf16.mxu0 0
  %69 = vmatpush1.bf16.msra.mxu0 0
  %70 = vmatprep.subr.bf16.mxu0 0
  %71 = vmatpush1.bf16.msra.mxu0 0
  %72 = vmatprep.subr.bf16.mxu0 0
  %73 = vmatpush1.bf16.msra.mxu0 0
  %74 = vmatprep.subr.bf16.mxu0 0
  %75 = vmatpush1.bf16.msra.mxu0 0
  %76 = vmatprep.subr.bf16.mxu0 0
  %77 = vmatpush1.bf16.msra.mxu0 %v54
  %78 = vmatprep.subr.bf16.mxu0 0
  %79 = vmatpush1.bf16.msra.mxu0 %v53
  %80 = vmatprep.subr.bf16.mxu0 0
  %81 = vmatpush2.bf16.msra.mxu0 0
  %82 = vmatprep.subr.bf16.mxu0 0
  %83 = vmatpush2.bf16.msra.mxu0 0
  %84 = vmatprep.subr.bf16.mxu0 0
  %85 = vmatpush2.bf16.msra.mxu0 0
  %86 = vmatprep.subr.bf16.mxu0 0
  %87 = vmatpush2.bf16.msra.mxu0 0
  %88 = vmatprep.subr.bf16.mxu0 0
  %89 = vmatpush2.bf16.msra.mxu0 0
  %90 = vmatprep.subr.bf16.mxu0 0
  %91 = vmatpush2.bf16.msra.mxu0 0
  %92 = vmatprep.subr.bf16.mxu0 0
  %93 = vmatpush2.bf16.msra.mxu0 0
  %94 = vmatprep.subr.bf16.mxu0 0
  %95 = vmatpush2.bf16.msra.mxu0 0
  %96 = vmatprep.mubr.bf16.mxu0 0
  %97 = vmatmul.mubr.bf16.gmra.mxu0 %v59
  %v98 = vpop.f32.mrf.mxu0
  %v99 = vadd.f32 %v43, %v98
  %v100 = vpop.f32.mrf.mxu0
  %v101 = vpop.f32.mrf.mxu0
  %v102 = vadd.f32 %v43, %v101
  %v103 = vpop.f32.mrf.mxu0
  %104 = vmatprep.mubr.bf16.mxu0 0
  %105 = vmatmul.mubr.bf16.gmra.mxu0 %v62
  %v106 = vpop.f32.mrf.mxu0
  %v107 = vadd.f32 %v43, %v106
  %v108 = vpop.f32.mrf.mxu0
  %v109 = vpop.f32.mrf.mxu0
  %v110 = vadd.f32 %v43, %v109
  %v111 = vpop.f32.mrf.mxu0
  %112 = vdwg.mxu0
  %v113 = vmax.f32 %v99, 0.0
  %v114 = vmax.f32 %v102, 0.0
  %v115 = vmax.f32 %v107, 0.0
  %v116 = vmax.f32 %v110, 0.0
  %118 = vset.pattern.permute.xlu0 0
  %119 = vperm.xlu0 %118, %v24
  %v120 = vpop.permute.xlu0 %119
  %123 = vset.pattern.permute.xlu0 0
  %124 = vperm.xlu0 %123, %v25
  %v125 = vpop.permute.xlu0 %124
  %128 = vset.pattern.permute.xlu0 0
  %129 = vperm.xlu0 %128, %v26
  %v130 = vpop.permute.xlu0 %129
  %133 = vset.pattern.permute.xlu0 0
  %134 = vperm.xlu0 %133, %v27
  %v135 = vpop.permute.xlu0 %134
  %v137 = vmul.f32 %v113, %v120
  %v138 = vmul.f32 %v114, %v125
  %v139 = vmul.f32 %v115, %v130
  %v140 = vmul.f32 %v116, %v135
  %v141 = vpack.c.bf16 %v138, %v137
  %v142 = vpack.c.bf16 %v140, %v139
  %v143 = vld [vmem:[%s3] sm:$0xf]
  %v144 = vld [vmem:[%s3 + $0x4] sm:$0xf]
  %v145 = vld [vmem:[%s3 + $0x8] sm:$0xf]
  %v146 = vld [vmem:[%s3 + $0xc] sm:$0xf]
  %v147 = vld [vmem:[%s3 + $0x10] sm:$0xf]
  %v148 = vld [vmem:[%s3 + $0x14] sm:$0xf]
  %v149 = vld [vmem:[%s3 + $0x18] sm:$0xf]
  %v150 = vld [vmem:[%s3 + $0x1c] sm:$0xf]
  %v151 = vld [vmem:[%s3 + $0x20] sm:$0xf]
  %v152 = vld [vmem:[%s3 + $0x24] sm:$0xf]
  %v153 = vld [vmem:[%s3 + $0x28] sm:$0xf]
  %v154 = vld [vmem:[%s3 + $0x2c] sm:$0xf]
  %v155 = vld [vmem:[%s3 + $0x30] sm:$0xf]
  %v156 = vld [vmem:[%s3 + $0x34] sm:$0xf]
  %v157 = vld [vmem:[%s3 + $0x38] sm:$0xf]
  %v158 = vld [vmem:[%s3 + $0x3c] sm:$0xf]
  %v159 = vld [vmem:[%s4] sm:$0x1]
  %v161 = vlaneseq
  %v162 = vshrl.u32 %v161, 7
  %v163 = vsub.s32 0, %v162
  %v164 = vrot.slane %v159, %v163
  %v182 = vunpack.c.l.b16 %v143
  %v183 = vunpack.c.l.b16 %v144
  %v184 = vunpack.c.l.b16 %v145
  %v185 = vunpack.c.l.b16 %v146
  %v186 = vunpack.c.l.b16 %v147
  %v187 = vunpack.c.l.b16 %v148
  %v188 = vunpack.c.l.b16 %v149
  %v189 = vunpack.c.l.b16 %v150
  %v190 = vunpack.c.l.b16 %v151
  %v191 = vunpack.c.l.b16 %v152
  %v192 = vunpack.c.l.b16 %v153
  %v193 = vunpack.c.l.b16 %v154
  %v194 = vunpack.c.l.b16 %v155
  %v195 = vunpack.c.l.b16 %v156
  %v196 = vunpack.c.l.b16 %v157
  %v197 = vunpack.c.l.b16 %v158
  %v198 = vpack.c.b16 %v183, %v182
  %v199 = vpack.c.b16 %v185, %v184
  %v200 = vpack.c.b16 %v187, %v186
  %v201 = vpack.c.b16 %v189, %v188
  %v202 = vpack.c.b16 %v191, %v190
  %v203 = vpack.c.b16 %v193, %v192
  %v204 = vpack.c.b16 %v195, %v194
  %v205 = vpack.c.b16 %v197, %v196
  %214 = vmatprep.subr.bf16.mxu0 0
  %215 = vmatpush1.bf16.msra.mxu0 %v205
  %216 = vmatprep.subr.bf16.mxu0 0
  %217 = vmatpush1.bf16.msra.mxu0 %v204
  %218 = vmatprep.subr.bf16.mxu0 0
  %219 = vmatpush1.bf16.msra.mxu0 %v203
  %220 = vmatprep.subr.bf16.mxu0 0
  %221 = vmatpush1.bf16.msra.mxu0 %v202
  %222 = vmatprep.subr.bf16.mxu0 0
  %223 = vmatpush1.bf16.msra.mxu0 %v201
  %224 = vmatprep.subr.bf16.mxu0 0
  %225 = vmatpush1.bf16.msra.mxu0 %v200
  %226 = vmatprep.subr.bf16.mxu0 0
  %227 = vmatpush1.bf16.msra.mxu0 %v199
  %228 = vmatprep.subr.bf16.mxu0 0
  %229 = vmatpush1.bf16.msra.mxu0 %v198
  %230 = vmatprep.subr.bf16.mxu0 0
  %231 = vmatpush2.bf16.msra.mxu0 0
  %232 = vmatprep.subr.bf16.mxu0 0
  %233 = vmatpush2.bf16.msra.mxu0 0
  %234 = vmatprep.subr.bf16.mxu0 0
  %235 = vmatpush2.bf16.msra.mxu0 0
  %236 = vmatprep.subr.bf16.mxu0 0
  %237 = vmatpush2.bf16.msra.mxu0 0
  %238 = vmatprep.subr.bf16.mxu0 0
  %239 = vmatpush2.bf16.msra.mxu0 0
  %240 = vmatprep.subr.bf16.mxu0 0
  %241 = vmatpush2.bf16.msra.mxu0 0
  %242 = vmatprep.subr.bf16.mxu0 0
  %243 = vmatpush2.bf16.msra.mxu0 0
  %244 = vmatprep.subr.bf16.mxu0 0
  %245 = vmatpush2.bf16.msra.mxu0 0
  %246 = vmatprep.mubr.bf16.mxu0 0
  %247 = vmatmul.mubr.bf16.gmra.mxu0 %v141
  %v248 = vpop.f32.mrf.mxu0
  %v249 = vadd.f32 %v164, %v248
  %v250 = vpop.f32.mrf.mxu0
  %v251 = vpop.f32.mrf.mxu0
  %v252 = vadd.f32 %v164, %v251
  %v253 = vpop.f32.mrf.mxu0
  %254 = vmatprep.mubr.bf16.mxu0 0
  %255 = vmatmul.mubr.bf16.gmra.mxu0 %v142
  %v256 = vpop.f32.mrf.mxu0
  %v257 = vadd.f32 %v164, %v256
  %v258 = vpop.f32.mrf.mxu0
  %v259 = vpop.f32.mrf.mxu0
  %v260 = vadd.f32 %v164, %v259
  %v261 = vpop.f32.mrf.mxu0
  %262 = vdwg.mxu0
  %v263 = vmax.f32 %v249, 0.0
  %v264 = vmax.f32 %v252, 0.0
  %v265 = vmax.f32 %v257, 0.0
  %v266 = vmax.f32 %v260, 0.0
  %v267 = vmul.f32 %v263, %v120
  %v268 = vmul.f32 %v264, %v125
  %v269 = vmul.f32 %v265, %v130
  %v270 = vmul.f32 %v266, %v135
  %v271 = vpack.c.bf16 %v268, %v267
  %v272 = vpack.c.bf16 %v270, %v269
  %v275 = vunpack.c.l.b16 %v271
  %v276 = vunpack.c.h.b16 %v271
  %v277 = vunpack.c.l.b16 %v272
  %v278 = vunpack.c.h.b16 %v272
  %v279 = vpack.c.b16 %v275, %v275
  %v280 = vpack.c.b16 %v276, %v276
  %v281 = vpack.c.b16 %v277, %v277
  %v282 = vpack.c.b16 %v278, %v278
  %287 = vst [vmem:[%s6] sm:$0xf] %v279
  %288 = vst [vmem:[%s6 + $0x4] sm:$0xf] %v280
  %289 = vst [vmem:[%s6 + $0x8] sm:$0xf] %v281
  %290 = vst [vmem:[%s6 + $0xc] sm:$0xf] %v282
  // Predicated region
  $region26: #{compose_seq2seq_encoder.1} parent=0 // pred_check
    _
  $region27: #{compose_seq2seq_encoder.1} parent=0 // pred_check_branch
    %292 = sbr.rel (0) target = $region29
  $region28: #{compose_seq2seq_encoder.1} parent=0 // pred_region
    _
  $region29: #{compose_seq2seq_encoder.1} parent=0 // pred_fallthru
    _
  // Predicated region
  $region30: #{compose_seq2seq_encoder.1} parent=0 // pred_check
    _
  $region31: #{compose_seq2seq_encoder.1} parent=0 // pred_check_branch
    %294 = sbr.rel (0) target = $region33
  $region32: #{compose_seq2seq_encoder.1} parent=0 // pred_region
    _
  $region33: #{compose_seq2seq_encoder.1} parent=0 // pred_fallthru
    _

</llo_original>
